<compile_context>
chip_gen: v6e
topology: v6e:2x2x1
jax: 0.10.0
libtpu: 0.0.40
codegen_flags: <defaults>
</compile_context>

<pallas_src>
import functools

import jax
import jax.numpy as jnp
from jax.experimental import pallas as pl
from jax.experimental.pallas import tpu as pltpu

_MIB = 1024 * 1024


def _round_up(x: int, m: int) -> int:
    return (x + m - 1) // m * m


def _vmem_capacity_bytes() -> int:
    """Physical VMEM per TensorCore (64 MiB on v7x, 128 MiB on v5e/v6e)."""
    try:
        cap = int(getattr(pltpu.get_tpu_info(), "vmem_capacity_bytes", 0) or 0)
        if cap > 0:
            return cap
    except Exception:
        pass
    return 64 * _MIB  # conservative default (v7x)


def _choose_tf(d_ff, max_tf=512):
    """d_ff reduction chunk: largest 128-aligned divisor of d_ff <= max_tf."""
    if d_ff <= max_tf:
        return d_ff
    t = (max_tf // 128) * 128
    while t >= 128:
        if d_ff % t == 0:
            return t
        t -= 128
    return d_ff  # d_ff not a multiple of 128: no chunking


def prepare_swiglu_weights(w1, w2, w3, tf=None):
    """One-time weight prep; hoist out of the forward path and cache the result.

    Returns (w13, w2t, tf):
      w13: [d_model, 2*d_ff], tile-interleaved so d_ff-chunk f occupies the
           contiguous columns [f*2*tf, (f+1)*2*tf) as [w1_f.T | w3_f.T].
      w2t: [d_ff, d_model] = w2.T
    """
    d_ff, d_model = w1.shape
    assert w3.shape == (d_ff, d_model) and w2.shape == (d_model, d_ff)
    if tf is None:
        tf = _choose_tf(d_ff)
    assert d_ff % tf == 0
    n_f = d_ff // tf
    w13 = jnp.concatenate(
        [w1.T.reshape(d_model, n_f, tf), w3.T.reshape(d_model, n_f, tf)],
        axis=2,
    ).reshape(d_model, 2 * d_ff)
    return w13, w2.T, tf


# ---------------------------------------------------------------------------
# Kernels
# ---------------------------------------------------------------------------
def _swiglu_stream_kernel(x_ref, w13_ref, w2t_ref, o_ref, acc_ref, *, tf):
    """Streaming path.  grid = (M tiles, d_ff tiles); d_ff (reduction) is inner.

    x_ref  : (tm, d_model)
    w13_ref: (d_model, 2*tf)   -- [w1_f.T | w3_f.T]
    w2t_ref: (tf, d_model)
    o_ref  : (tm, d_model)     -- resident across the f axis
    acc_ref: (tm, d_model) f32 accumulator scratch
    """
    f = pl.program_id(1)
    last = pl.num_programs(1) - 1

    x = x_ref[...]
    h = jnp.dot(x, w13_ref[...], preferred_element_type=jnp.float32)  # (tm, 2*tf)
    h1 = h[:, :tf]
    h3 = h[:, tf:]
    g = (h1 * jax.nn.sigmoid(h1)) * h3                                # SiLU(x1)*x3
    partial = jnp.dot(g.astype(w2t_ref.dtype), w2t_ref[...],
                      preferred_element_type=jnp.float32)             # (tm, d_model)

    is_first = f == 0
    is_last = f == last

    @pl.when(jnp.logical_and(is_first, is_last))        # n_f == 1: direct store
    def _():
        o_ref[...] = partial.astype(o_ref.dtype)

    @pl.when(jnp.logical_and(is_first, jnp.logical_not(is_last)))
    def _():
        acc_ref[...] = partial                           # no zero-init + RMW

    @pl.when(jnp.logical_and(jnp.logical_not(is_first), jnp.logical_not(is_last)))
    def _():
        acc_ref[...] += partial

    @pl.when(jnp.logical_and(jnp.logical_not(is_first), is_last))
    def _():                                             # fused epilogue
        o_ref[...] = (acc_ref[...] + partial).astype(o_ref.dtype)


def _swiglu_resident_kernel(x_ref, w13_ref, w2t_ref, o_ref, *, tf, n_f):
    """Weight-resident path.  grid = (M tiles,); weights DMA'd to VMEM once.

    x_ref  : (tm, d_model)
    w13_ref: (d_model, 2*d_ff) full, constant block index -> fetched once
    w2t_ref: (d_ff, d_model)   full, constant block index -> fetched once
    o_ref  : (tm, d_model)
    """
    x = x_ref[...]

    if n_f == 1:
        h = jnp.dot(x, w13_ref[...], preferred_element_type=jnp.float32)
        h1 = h[:, :tf]
        h3 = h[:, tf:]
        g = (h1 * jax.nn.sigmoid(h1)) * h3
        o_ref[...] = jnp.dot(g.astype(w2t_ref.dtype), w2t_ref[...],
                             preferred_element_type=jnp.float32).astype(o_ref.dtype)
        return

    def body(f, acc):
        c13 = pl.multiple_of(f * (2 * tf), 2 * tf)
        c2 = pl.multiple_of(f * tf, tf)
        h = jnp.dot(x, w13_ref[:, pl.ds(c13, 2 * tf)],
                    preferred_element_type=jnp.float32)               # (tm, 2*tf)
        h1 = h[:, :tf]
        h3 = h[:, tf:]
        g = (h1 * jax.nn.sigmoid(h1)) * h3
        return acc + jnp.dot(g.astype(w2t_ref.dtype),
                             w2t_ref[pl.ds(c2, tf), :],
                             preferred_element_type=jnp.float32)

    acc = jax.lax.fori_loop(
        0, n_f, body, jnp.zeros((x.shape[0], o_ref.shape[-1]), jnp.float32))
    o_ref[...] = acc.astype(o_ref.dtype)


# ---------------------------------------------------------------------------
# Planning + wrapper
# ---------------------------------------------------------------------------
def _plan_tiles(M, d_model, d_ff, tf, x_dtype, w_dtype, out_dtype, force_path=None):
    xb = jnp.dtype(x_dtype).itemsize
    wb = jnp.dtype(w_dtype).itemsize
    ob = jnp.dtype(out_dtype).itemsize
    cap = _vmem_capacity_bytes()
    budget = max(cap - 8 * _MIB, cap // 2)

    sub = max(8, 32 // max(xb, 1))            # sublane multiple: 8 f32 / 16 bf16 / 32 int8
    tm_cap = _round_up(max(M, 1), sub)
    if M >= 2 * sub:
        # Keep >= 2 M tiles so the "parallel" axis can span both v7x TensorCores.
        tm_cap = min(tm_cap, _round_up((M + 1) // 2, sub))

    cands = sorted(
        {min(_round_up(c, sub), tm_cap)
         for c in (1024, 768, 512, 384, 256, 192, 128, 96, 64, 48, 32, 16, 8)},
        reverse=True)

    def stream_bytes(tm):
        w = 2 * (d_model * 2 * tf + tf * d_model) * wb        # double-buffered weight tiles
        act = 2 * tm * d_model * (xb + ob)                    # double-buffered x / out tiles
        acc = tm * d_model * 4                                # f32 accumulator scratch
        inter = tm * 3 * tf * 4 + tm * d_model * 4            # f32 h, g, partial
        return w + act + acc + inter

    def resident_bytes(tm):
        w = 2 * 3 * d_ff * d_model * wb                       # full weight set (x2: conservative)
        act = 2 * tm * d_model * (xb + ob)
        inter = tm * 3 * tf * 4 + 2 * tm * d_model * 4        # f32 h, g + carry acc + partial
        return w + act + inter

    tm_stream = next((c for c in cands if stream_bytes(c) <= budget), cands[-1])
    tm_res = next((c for c in cands if resident_bytes(c) <= budget), None)

    if force_path == "stream":
        path, tm = "stream", tm_stream
    elif force_path == "resident" and tm_res is not None:
        path, tm = "resident", tm_res
    elif tm_res is not None and tm_res >= tm_stream:
        path, tm = "resident", tm_res
    else:
        path, tm = "stream", tm_stream

    need = resident_bytes(tm) if path == "resident" else stream_bytes(tm)
    vmem_limit = int(min(max(need * 5 // 4, 32 * _MIB), cap - 4 * _MIB))
    return path, tm, vmem_limit


def swiglu_prepped(x, w13, w2t, *, tf, force_path=None):
    """SwiGLU forward with pre-transformed weights (see prepare_swiglu_weights)."""
    d_model = x.shape[-1]
    d_ff = w2t.shape[0]
    assert w2t.shape == (d_ff, d_model) and w13.shape == (d_model, 2 * d_ff)
    assert d_ff % tf == 0
    n_f = d_ff // tf

    orig_shape = x.shape
    x2d = x.reshape(-1, d_model)
    M = x2d.shape[0]

    path, tm, vmem_limit = _plan_tiles(
        M, d_model, d_ff, tf, x.dtype, w13.dtype, x.dtype, force_path=force_path)

    Mp = _round_up(M, tm)
    if Mp != M:
        x2d = jnp.pad(x2d, ((0, Mp - M), (0, 0)))
    n_m = Mp // tm

    xb = jnp.dtype(x.dtype).itemsize
    wb = jnp.dtype(w13.dtype).itemsize
    weight_bytes = 3 * d_ff * d_model * wb
    cost = pl.CostEstimate(
        flops=6 * Mp * d_ff * d_model,
        transcendentals=Mp * d_ff,
        bytes_accessed=2 * Mp * d_model * xb
        + (weight_bytes if path == "resident" else n_m * weight_bytes),
    )

    if path == "resident":
        out = pl.pallas_call(
            functools.partial(_swiglu_resident_kernel, tf=tf, n_f=n_f),
            out_shape=jax.ShapeDtypeStruct((Mp, d_model), x.dtype),
            grid_spec=pltpu.PrefetchScalarGridSpec(
                num_scalar_prefetch=0,
                grid=(n_m,),
                in_specs=[
                    pl.BlockSpec((tm, d_model), lambda i: (i, 0)),
                    pl.BlockSpec((d_model, 2 * d_ff), lambda i: (0, 0)),  # DMA once
                    pl.BlockSpec((d_ff, d_model), lambda i: (0, 0)),      # DMA once
                ],
                out_specs=pl.BlockSpec((tm, d_model), lambda i: (i, 0)),
            ),
            compiler_params=pltpu.CompilerParams(
                dimension_semantics=("parallel",),
                vmem_limit_bytes=vmem_limit,
            ),
            cost_estimate=cost,
        )(x2d, w13, w2t)
    else:
        out = pl.pallas_call(
            functools.partial(_swiglu_stream_kernel, tf=tf),
            out_shape=jax.ShapeDtypeStruct((Mp, d_model), x.dtype),
            grid_spec=pltpu.PrefetchScalarGridSpec(
                num_scalar_prefetch=0,
                grid=(n_m, n_f),
                in_specs=[
                    pl.BlockSpec((tm, d_model), lambda i, f: (i, 0)),      # x tile
                    pl.BlockSpec((d_model, 2 * tf), lambda i, f: (0, f)),  # [w1|w3].T tile
                    pl.BlockSpec((tf, d_model), lambda i, f: (f, 0)),      # w2.T tile
                ],
                out_specs=pl.BlockSpec((tm, d_model), lambda i, f: (i, 0)),
                scratch_shapes=[pltpu.VMEM((tm, d_model), jnp.float32)],
            ),
            compiler_params=pltpu.CompilerParams(
                dimension_semantics=("parallel", "arbitrary"),
                vmem_limit_bytes=vmem_limit,
            ),
            cost_estimate=cost,
        )(x2d, w13, w2t)

    if Mp != M:
        out = out[:M]
    return out.reshape(orig_shape)


def swiglu(x, w1, w2, w3):
    """Convenience wrapper; prefer prepare_swiglu_weights() once + swiglu_prepped()."""
    w13, w2t, tf = prepare_swiglu_weights(w1, w2, w3)
    return swiglu_prepped(x, w13, w2t, tf=tf)


def swiglu_ref(x, w1, w2, w3):
    x1 = jnp.einsum('...d,fd->...f', x, w1)
    x3 = jnp.einsum('...d,fd->...f', x, w3)
    return jnp.einsum('...f,df->...d', (x1 * jax.nn.sigmoid(x1)) * x3, w2)


if __name__ == "__main__":
    d_model, d_ff = 256, 512
    batch, seq = 2, 16

    key = jax.random.PRNGKey(0)
    kx, k1, k2, k3 = jax.random.split(key, 4)
    x = jax.random.normal(kx, (batch, seq, d_model), dtype=jnp.float32)
    # Deterministic synthetic weights (module's __init__ only defines shapes).
    w1 = jax.random.normal(k1, (d_ff, d_model), dtype=jnp.float32) * 0.02
    w2 = jax.random.normal(k2, (d_model, d_ff), dtype=jnp.float32) * 0.02
    w3 = jax.random.normal(k3, (d_ff, d_model), dtype=jnp.float32) * 0.02

    ref = swiglu_ref(x, w1, w2, w3)

    # One-time weight prep (hoisted out of the per-call path) + auto-planned
    # kernel.  At these shapes this takes the weight-resident path.
    w13, w2t, tf = prepare_swiglu_weights(w1, w2, w3)
    fwd = jax.jit(functools.partial(swiglu_prepped, tf=tf))
    out = jax.block_until_ready(fwd(x, w13, w2t))
    assert out.shape == x.shape
    assert jnp.allclose(out, ref, atol=1e-3, rtol=1e-3), "auto path mismatch"

    # Ragged token count (exercises the M-padding / slicing path).
    x_odd = jax.random.normal(kx, (batch, 7, d_model), dtype=jnp.float32)
    out_odd = jax.block_until_ready(fwd(x_odd, w13, w2t))
    assert out_odd.shape == x_odd.shape
    assert jnp.allclose(out_odd, swiglu_ref(x_odd, w1, w2, w3),
                        atol=1e-3, rtol=1e-3), "ragged mismatch"

    # Exercise the other two code paths at small scale:
    #  (a) weight-resident with in-kernel d_ff loop (n_f > 1),
    #  (b) streaming (grid = (M, d_ff)) fallback with the fused epilogue.
    w13_c, w2t_c, tf_c = prepare_swiglu_weights(w1, w2, w3, tf=128)
    out_res = jax.block_until_ready(
        swiglu_prepped(x, w13_c, w2t_c, tf=tf_c, force_path="resident"))
    assert jnp.allclose(out_res, ref, atol=1e-3, rtol=1e-3), "resident-loop mismatch"

    out_stream = jax.block_until_ready(
        swiglu_prepped(x, w13_c, w2t_c, tf=tf_c, force_path="stream"))
    assert jnp.allclose(out_stream, ref, atol=1e-3, rtol=1e-3), "stream mismatch"

    print("KERNEL_OK")
</pallas_src>

<mosaic_0001>
module attributes {stable_mosaic.version = 11 : i64} {
  func.func @_swiglu_resident_kernel(%arg0: i32, %arg1: memref<16x256xf32, #tpu.memory_space<vmem>>, %arg2: memref<256x1024xf32, #tpu.memory_space<vmem>>, %arg3: memref<512x256xf32, #tpu.memory_space<vmem>>, %arg4: memref<16x256xf32, #tpu.memory_space<vmem>>) attributes {dimension_semantics = [#tpu.dimension_semantics<parallel>], iteration_bounds = array<i64: 2>, scalar_prefetch = 0 : i64, scratch_operands = 0 : i64, tpu.core_type = #tpu.core_type<tc>, window_params = [{transform_indices = @transform_0, window_bounds = array<i64: 16, 256>}, {pipeline_mode = #tpu.pipeline_mode<synchronous>, transform_indices = @transform_1, window_bounds = array<i64: 256, 1024>}, {pipeline_mode = #tpu.pipeline_mode<synchronous>, transform_indices = @transform_2, window_bounds = array<i64: 512, 256>}, {transform_indices = @transform_3, window_bounds = array<i64: 16, 256>}]} {
    %c0 = arith.constant 0 : index
    %c0_0 = arith.constant 0 : index
    %0 = vector.load %arg1[%c0, %c0_0] : memref<16x256xf32, #tpu.memory_space<vmem>>, vector<16x256xf32>
    %c0_1 = arith.constant 0 : index
    %c0_2 = arith.constant 0 : index
    %1 = vector.load %arg2[%c0_1, %c0_2] : memref<256x1024xf32, #tpu.memory_space<vmem>>, vector<256x1024xf32>
    %cst = arith.constant dense<0.000000e+00> : vector<16x1024xf32>
    %2 = tpu.matmul %0, %1, %cst {dimension_numbers = #tpu.dot_dimension_numbers<[1], [0], [0], [1], [0, 0, 1, 1], [], []>} : vector<16x256xf32>, vector<256x1024xf32>, vector<16x1024xf32> -> vector<16x1024xf32>
    %3 = vector.extract_strided_slice %2 {offsets = [0, 0], sizes = [16, 512], strides = [1, 1]} : vector<16x1024xf32> to vector<16x512xf32>
    %4 = vector.extract_strided_slice %2 {offsets = [0, 512], sizes = [16, 512], strides = [1, 1]} : vector<16x1024xf32> to vector<16x512xf32>
    %5 = arith.negf %3 : vector<16x512xf32>
    %6 = math.exp %5 : vector<16x512xf32>
    %cst_3 = arith.constant 1.000000e+00 : f32
    %7 = vector.broadcast %cst_3 : f32 to vector<16x512xf32>
    %8 = arith.addf %7, %6 : vector<16x512xf32>
    %9 = arith.divf %7, %8 : vector<16x512xf32>
    %10 = arith.mulf %3, %9 : vector<16x512xf32>
    %11 = arith.mulf %10, %4 : vector<16x512xf32>
    %c0_4 = arith.constant 0 : index
    %c0_5 = arith.constant 0 : index
    %12 = vector.load %arg3[%c0_4, %c0_5] : memref<512x256xf32, #tpu.memory_space<vmem>>, vector<512x256xf32>
    %cst_6 = arith.constant dense<0.000000e+00> : vector<16x256xf32>
    %13 = tpu.matmul %11, %12, %cst_6 {dimension_numbers = #tpu.dot_dimension_numbers<[1], [0], [0], [1], [0, 0, 1, 1], [], []>} : vector<16x512xf32>, vector<512x256xf32>, vector<16x256xf32> -> vector<16x256xf32>
    %c0_7 = arith.constant 0 : index
    %c0_8 = arith.constant 0 : index
    %14 = vector.load %arg4[%c0_7, %c0_8] : memref<16x256xf32, #tpu.memory_space<vmem>>, vector<16x256xf32>
    tpu.vector_store %arg4[%c0_7, %c0_8], %13 {strides = array<i32>} : memref<16x256xf32, #tpu.memory_space<vmem>>, vector<16x256xf32>,
    return
  }
  func.func @transform_0(%arg0: i32) -> (i32, i32) {
    %c0_i32 = arith.constant 0 : i32
    %c0_i32_0 = arith.constant 0 : i32
    return %arg0, %c0_i32 : i32, i32
  }
  func.func @transform_1(%arg0: i32) -> (i32, i32) {
    %c0_i32 = arith.constant 0 : i32
    %c0_i32_0 = arith.constant 0 : i32
    %c0_i32_1 = arith.constant 0 : i32
    return %c0_i32, %c0_i32_0 : i32, i32
  }
  func.func @transform_2(%arg0: i32) -> (i32, i32) {
    %c0_i32 = arith.constant 0 : i32
    %c0_i32_0 = arith.constant 0 : i32
    %c0_i32_1 = arith.constant 0 : i32
    return %c0_i32, %c0_i32_0 : i32, i32
  }
  func.func @transform_3(%arg0: i32) -> (i32, i32) {
    %c0_i32 = arith.constant 0 : i32
    %c0_i32_0 = arith.constant 0 : i32
    return %arg0, %c0_i32 : i32, i32
  }
}

</mosaic_0001>

<llo_original>
// kernel: swiglu_prepped.1
$region0: #{swiglu_prepped.1}
  #allocation0 [shape = 'u32[]', space=smem, size = 0x4, offset = 0x4, fixed_abs, tag = 'smem constant byte address 0x4 - core index']
  #allocation1 [shape = 'u32[144,128]{1,0:T(1,128)}', space=vmem, size = 0x12000, scoped, tag = 'internal scratch']
  %s0 = inlined_call_operand.hbm [shape: f32[32,256], index: 0, kind: input, shape index: {}]
  %s1 = inlined_call_operand.hbm [shape: f32[256,1024], index: 1, kind: input, shape index: {}]
  %s2 = inlined_call_operand.hbm [shape: f32[512,256], index: 2, kind: input, shape index: {}]
  %s3 = inlined_call_operand.hbm [shape: f32[32,256], index: 3, kind: output, shape index: {}]
  %s4 = sld [smem:[#allocation0]]
  $region57: #{swiglu_prepped.1} parent=0
    _
  %s6 = ssub.s32 1, %s4
  %s7 = scalar_select 0, %s6, %s4
  $region1: #{swiglu_prepped.1} parent=0
    #allocation2 [shape = 'u8[32768]{0}', space=vmem, size = 0x8000, scoped, tag = 'input window, operand 0']
    #allocation3 [shape = 's32[2]{0}', space=sflag, size = 0x8, scoped, tag = 'scoped memory for swiglu_prepped.1']
    #allocation4 [shape = 's32[2]{0}', space=sflag, size = 0x8, scoped, tag = 'scoped memory for swiglu_prepped.1']
    #allocation5 [shape = 'u8[1048576]{0}', space=vmem, size = 0x100000, scoped, tag = 'input window, operand 1, single buffered']
    #allocation6 [shape = 's32[1]{0}', space=sflag, size = 0x4, scoped, tag = 'scoped memory for swiglu_prepped.1']
    #allocation7 [shape = 'u8[524288]{0}', space=vmem, size = 0x80000, scoped, tag = 'input window, operand 2, single buffered']
    #allocation8 [shape = 'u8[32768]{0}', space=vmem, size = 0x8000, scoped, tag = 'output window, operand 0']
    %8 = vsyncpa [#allocation3], 0
    %s9 = scalar_lea.sflag [#allocation3], 1
    %10 = vsyncpa %s9, 0
    %11 = vsyncpa [#allocation6], 0
    %12 = vsyncpa [#allocation4], 0
    %s13 = scalar_lea.sflag [#allocation4], 1
    %14 = vsyncpa %s13, 0
    loop: start=0, step=1, limit=4
    $region2: #{swiglu_prepped.1} parent=1 // loop_pre_header
      _
    $region3: #{swiglu_prepped.1} parent=1 // loop_header
      %s16 = sphi 0, %s20
      %p17 = scmp.ge.s32.totalorder %s16, 4
      %s26 = sphi 0, %s28
      %s29 = sphi 0, %s26
      %s30 = sphi 0, %s29
      %s46 = sphi 0, %s30
      %s50 = sphi 0, %s50
      %s52 = sphi 0, %s50
      %s53 = sphi 0, %s52
      %s67 = sphi 0, %s53
      %s71 = sphi 0, %s71
      %s73 = sphi 0, %s71
      %s74 = sphi 0, %s73
      %s88 = sphi 0, %s74
      %s94 = sphi 0, %s96
      %s97 = sphi 0, %s94
      %s98 = sphi 0, %s97
      %s114 = sphi 0, %s98
    $region4: #{swiglu_prepped.1} parent=1 // loop_header_branch
      %19 = sbr.rel (%p17) target = $region8
    $region5: #{swiglu_prepped.1} parent=1 // loop_body
      %s21 = ssub.s32 %s16, 1
      %s22 = ssub.s32 %s16, 2
      %s23 = sadd.s32 %s16, 1
      %s24 = ssub.s32 %s16, %s23
      %p25 = scmp.eq.s32.totalorder %s24, 0
      %s27 = sadd.s32 %s26, 1
      %s28 = scalar_select %p25, %s26, %s27
      %p31 = pneg %p25
      %p32 = scmp.eq.s32.totalorder %s16, 1
      %p33 = por %p31, %p32
      %p34 = scmp.ne.s32.totalorder %s26, %s29
      %p35 = scmp.eq.s32.totalorder %s16, 0
      %p36 = por %p34, %p35
      %p37 = scmp.ne.s32.totalorder %s26, %s29
      %p38 = scmp.eq.s32.totalorder %s21, 1
      %p39 = por %p37, %p38
      %p40 = scmp.ne.s32.totalorder %s29, %s30
      %p41 = scmp.eq.s32.totalorder %s21, 0
      %p42 = por %p40, %p41
      %p43 = scmp.ne.s32.totalorder %s29, %s30
      %p44 = scmp.eq.s32.totalorder %s22, 1
      %p45 = por %p43, %p44
      %p47 = scmp.ne.s32.totalorder %s30, %s46
      %p48 = scmp.eq.s32.totalorder %s22, 0
      %p49 = por %p47, %p48
      %s51 = sadd.s32 %s50, 1
      %p54 = scmp.eq.s32.totalorder %s16, 1
      %p55 = scmp.ne.s32.totalorder %s50, %s52
      %p56 = scmp.eq.s32.totalorder %s16, 0
      %p57 = por %p55, %p56
      %p58 = scmp.ne.s32.totalorder %s50, %s52
      %p59 = scmp.eq.s32.totalorder %s21, 1
      %p60 = por %p58, %p59
      %p61 = scmp.ne.s32.totalorder %s52, %s53
      %p62 = scmp.eq.s32.totalorder %s21, 0
      %p63 = por %p61, %p62
      %p64 = scmp.ne.s32.totalorder %s52, %s53
      %p65 = scmp.eq.s32.totalorder %s22, 1
      %p66 = por %p64, %p65
      %p68 = scmp.ne.s32.totalorder %s53, %s67
      %p69 = scmp.eq.s32.totalorder %s22, 0
      %p70 = por %p68, %p69
      %s72 = sadd.s32 %s71, 1
      %p75 = scmp.eq.s32.totalorder %s16, 1
      %p76 = scmp.ne.s32.totalorder %s71, %s73
      %p77 = scmp.eq.s32.totalorder %s16, 0
      %p78 = por %p76, %p77
      %p79 = scmp.ne.s32.totalorder %s71, %s73
      %p80 = scmp.eq.s32.totalorder %s21, 1
      %p81 = por %p79, %p80
      %p82 = scmp.ne.s32.totalorder %s73, %s74
      %p83 = scmp.eq.s32.totalorder %s21, 0
      %p84 = por %p82, %p83
      %p85 = scmp.ne.s32.totalorder %s73, %s74
      %p86 = scmp.eq.s32.totalorder %s22, 1
      %p87 = por %p85, %p86
      %p89 = scmp.ne.s32.totalorder %s74, %s88
      %p90 = scmp.eq.s32.totalorder %s22, 0
      %p91 = por %p89, %p90
      %s92 = ssub.s32 %s16, %s23
      %p93 = scmp.eq.s32.totalorder %s92, 0
      %s95 = sadd.s32 %s94, 1
      %s96 = scalar_select %p93, %s94, %s95
      %p99 = pneg %p93
      %p100 = scmp.eq.s32.totalorder %s16, 1
      %p101 = por %p99, %p100
      %p102 = scmp.ne.s32.totalorder %s94, %s97
      %p103 = scmp.eq.s32.totalorder %s16, 0
      %p104 = por %p102, %p103
      %p105 = scmp.ne.s32.totalorder %s94, %s97
      %p106 = scmp.eq.s32.totalorder %s21, 1
      %p107 = por %p105, %p106
      %p108 = scmp.ne.s32.totalorder %s97, %s98
      %p109 = scmp.eq.s32.totalorder %s21, 0
      %p110 = por %p108, %p109
      %p111 = scmp.ne.s32.totalorder %s97, %s98
      %p112 = scmp.eq.s32.totalorder %s22, 1
      %p113 = por %p111, %p112
      %p115 = scmp.ne.s32.totalorder %s98, %s114
      %p116 = scmp.eq.s32.totalorder %s22, 0
      %p117 = por %p115, %p116
      %p118 = scmp.le.s32.totalorder 1, %s16
      %p119 = scmp.lt.s32.totalorder %s16, 3
      %p120 = pnand %p118, %p119
      %p121 = pneg %p120
      // Predicated region
      $region9: #{swiglu_prepped.1} parent=5 // pred_check
        _
      $region10: #{swiglu_prepped.1} parent=5 // pred_check_branch
        %123 = sbr.rel (%p120) target = $region12
      $region11: #{swiglu_prepped.1} parent=5 // pred_region
        %s124 = ssub.s32 %s16, 1
        // Predicated region
        $region13: #{swiglu_prepped.1} parent=11 // pred_check
          %p125 = pneg %p63
        $region14: #{swiglu_prepped.1} parent=11 // pred_check_branch
          %127 = sbr.rel (%p125) target = $region16
        $region15: #{swiglu_prepped.1} parent=11 // pred_region
          %s129 = ssub.s32 32768, 32768
          %130 = vsyncadd [#allocation6], %s129
          %s131 = sshll.u32 [#allocation5], 4
          %s132 = int_to_ptr.vmem [resolvable:$true] %s131
          %137 = dma.hbm_to_vmem [thread:$0]  %s1, 32768, %s132, [#allocation6], 1024, 1024, 64
        $region16: #{swiglu_prepped.1} parent=11 // pred_fallthru
          _
        // Predicated region
        $region17: #{swiglu_prepped.1} parent=11 // pred_check
          %p138 = pneg %p84
        $region18: #{swiglu_prepped.1} parent=11 // pred_check_branch
          %140 = sbr.rel (%p138) target = $region20
        $region19: #{swiglu_prepped.1} parent=11 // pred_region
          %s142 = ssub.s32 16384, 16384
          %143 = vsyncadd [#allocation6], %s142
          %s144 = sshll.u32 [#allocation7], 4
          %s145 = int_to_ptr.vmem [resolvable:$true] %s144
          %150 = dma.hbm_to_vmem [thread:$0]  %s2, 16384, %s145, [#allocation6], 256, 256, 16
        $region20: #{swiglu_prepped.1} parent=11 // pred_fallthru
          _
      $region12: #{swiglu_prepped.1} parent=5 // pred_fallthru
        _
      %p151 = scmp.lt.s32.totalorder %s16, 2
      // Predicated region
      $region21: #{swiglu_prepped.1} parent=5 // pred_check
        %p152 = pneg %p151
      $region22: #{swiglu_prepped.1} parent=5 // pred_check_branch
        %154 = sbr.rel (%p152) target = $region24
      $region23: #{swiglu_prepped.1} parent=5 // pred_region
        // Predicated region
        $region25: #{swiglu_prepped.1} parent=23 // pred_check
          %p155 = pneg %p36
        $region26: #{swiglu_prepped.1} parent=23 // pred_check_branch
          %157 = sbr.rel (%p155) target = $region28
        $region27: #{swiglu_prepped.1} parent=23 // pred_region
          %s158 = sand.u32 %s26, 1
          %s159 = scalar_lea.sflag [#allocation3], %s158
          %s160 = sand.u32 %s26, 1
          %s161 = smul.addr %s160, 32
          %s162 = scalar_lea.vmem [#allocation2], %s161
          %s163 = smul.u32 2, %s16
          %s165 = ssub.s32 512, 512
          %166 = vsyncadd %s159, %s165
          %s167 = smul.addr %s163, 2
          %s168 = smul.addr %s167, 128
          %s169 = scalar_lea.hbm %s0, %s168
          %s170 = sshll.u32 %s162, 4
          %s171 = int_to_ptr.vmem [resolvable:$true] %s170
          %176 = dma.hbm_to_vmem [thread:$0]  %s169, 512, %s171, %s159, 256, 256, 16
        $region28: #{swiglu_prepped.1} parent=23 // pred_fallthru
          _
      $region24: #{swiglu_prepped.1} parent=5 // pred_fallthru
        _
      %p177 = scmp.le.s32.totalorder 1, %s16
      %p178 = scmp.lt.s32.totalorder %s16, 3
      %p179 = pnand %p177, %p178
      %p180 = pneg %p179
      // Predicated region
      $region29: #{swiglu_prepped.1} parent=5 // pred_check
        _
      $region30: #{swiglu_prepped.1} parent=5 // pred_check_branch
        %182 = sbr.rel (%p179) target = $region32
      $region31: #{swiglu_prepped.1} parent=5 // pred_region
        %s183 = ssub.s32 %s16, 1
        %s184 = sand.u32 %s29, 1
        %s185 = scalar_lea.sflag [#allocation3], %s184
        %s186 = sand.u32 %s29, 1
        %s187 = smul.addr %s186, 32
        %s188 = scalar_lea.vmem [#allocation2], %s187
        // Predicated region
        $region33: #{swiglu_prepped.1} parent=31 // pred_check
          %p189 = pneg %p42
        $region34: #{swiglu_prepped.1} parent=31 // pred_check_branch
          %191 = sbr.rel (%p189) target = $region36
        $region35: #{swiglu_prepped.1} parent=31 // pred_region
          %192 = dma.done %s185, 512
        $region36: #{swiglu_prepped.1} parent=31 // pred_fallthru
          _
        // Predicated region
        $region37: #{swiglu_prepped.1} parent=31 // pred_check
          %p193 = pneg %p63
        $region38: #{swiglu_prepped.1} parent=31 // pred_check_branch
          %195 = sbr.rel (%p193) target = $region40
        $region39: #{swiglu_prepped.1} parent=31 // pred_region
          %196 = dma.done [#allocation6], 32768
        $region40: #{swiglu_prepped.1} parent=31 // pred_fallthru
          _
        // Predicated region
        $region41: #{swiglu_prepped.1} parent=31 // pred_check
          %p197 = pneg %p84
        $region42: #{swiglu_prepped.1} parent=31 // pred_check_branch
          %199 = sbr.rel (%p197) target = $region44
        $region43: #{swiglu_prepped.1} parent=31 // pred_region
          %200 = dma.done [#allocation6], 16384
        $region44: #{swiglu_prepped.1} parent=31 // pred_fallthru
          _
        %s201 = sand.u32 %s29, 1
        %s202 = scalar_lea.sflag [#allocation3], %s201
        %s203 = sand.u32 %s29, 1
        %s204 = smul.addr %s203, 32
        %s205 = scalar_lea.vmem [#allocation2], %s204
        %p206 = pneg %p42
        %p207 = pneg %p39
        %p208 = pneg %p63
        %p209 = pneg %p60
        %p210 = pneg %p84
        %p211 = pneg %p81
        %p212 = pneg %p110
        %p213 = pneg %p107
        %s214 = sand.u32 %s97, 1
        %s215 = scalar_lea.sflag [#allocation4], %s214
        %s216 = sand.u32 %s97, 1
        %s217 = smul.addr %s216, 32
        %s218 = scalar_lea.vmem [#allocation8], %s217
        %s219 = smul.u32 2, %s21
        %s220 = smul.u32 2, %s21
        %v221 = vld [vmem:[%s188] sm:$0xff]
        %v222 = vld [vmem:[%s188 + $0x8] sm:$0xff]
        %v223 = vld [vmem:[%s188 + $0x10] sm:$0xff]
        %v224 = vld [vmem:[%s188 + $0x18] sm:$0xff]
        %v225 = vld [vmem:[#allocation5] sm:$0xff]
        %v226 = vld [vmem:[#allocation5 + $0x8] sm:$0xff]
        %v227 = vld [vmem:[#allocation5 + $0x10] sm:$0xff]
        %v228 = vld [vmem:[#allocation5 + $0x18] sm:$0xff]
        %v229 = vld [vmem:[#allocation5 + $0x20] sm:$0xff]
        %v230 = vld [vmem:[#allocation5 + $0x28] sm:$0xff]
        %v231 = vld [vmem:[#allocation5 + $0x30] sm:$0xff]
        %v232 = vld [vmem:[#allocation5 + $0x38] sm:$0xff]
        %v233 = vld [vmem:[#allocation5 + $0x40] sm:$0xff]
        %v234 = vld [vmem:[#allocation5 + $0x48] sm:$0xff]
        %v235 = vld [vmem:[#allocation5 + $0x50] sm:$0xff]
        %v236 = vld [vmem:[#allocation5 + $0x58] sm:$0xff]
        %v237 = vld [vmem:[#allocation5 + $0x60] sm:$0xff]
        %v238 = vld [vmem:[#allocation5 + $0x68] sm:$0xff]
        %v239 = vld [vmem:[#allocation5 + $0x70] sm:$0xff]
        %v240 = vld [vmem:[#allocation5 + $0x78] sm:$0xff]
        %v241 = vld [vmem:[#allocation5 + $0x80] sm:$0xff]
        %v242 = vld [vmem:[#allocation5 + $0x88] sm:$0xff]
        %v243 = vld [vmem:[#allocation5 + $0x90] sm:$0xff]
        %v244 = vld [vmem:[#allocation5 + $0x98] sm:$0xff]
        %v245 = vld [vmem:[#allocation5 + $0xa0] sm:$0xff]
        %v246 = vld [vmem:[#allocation5 + $0xa8] sm:$0xff]
        %v247 = vld [vmem:[#allocation5 + $0xb0] sm:$0xff]
        %v248 = vld [vmem:[#allocation5 + $0xb8] sm:$0xff]
        %v249 = vld [vmem:[#allocation5 + $0xc0] sm:$0xff]
        %v250 = vld [vmem:[#allocation5 + $0xc8] sm:$0xff]
        %v251 = vld [vmem:[#allocation5 + $0xd0] sm:$0xff]
        %v252 = vld [vmem:[#allocation5 + $0xd8] sm:$0xff]
        %v253 = vld [vmem:[#allocation5 + $0xe0] sm:$0xff]
        %v254 = vld [vmem:[#allocation5 + $0xe8] sm:$0xff]
        %v255 = vld [vmem:[#allocation5 + $0xf0] sm:$0xff]
        %v256 = vld [vmem:[#allocation5 + $0xf8] sm:$0xff]
        %v257 = vld [vmem:[#allocation5 + $0x100] sm:$0xff]
        %v258 = vld [vmem:[#allocation5 + $0x108] sm:$0xff]
        %v259 = vld [vmem:[#allocation5 + $0x110] sm:$0xff]
        %v260 = vld [vmem:[#allocation5 + $0x118] sm:$0xff]
        %v261 = vld [vmem:[#allocation5 + $0x120] sm:$0xff]
        %v262 = vld [vmem:[#allocation5 + $0x128] sm:$0xff]
        %v263 = vld [vmem:[#allocation5 + $0x130] sm:$0xff]
        %v264 = vld [vmem:[#allocation5 + $0x138] sm:$0xff]
        %v265 = vld [vmem:[#allocation5 + $0x140] sm:$0xff]
        %v266 = vld [vmem:[#allocation5 + $0x148] sm:$0xff]
        %v267 = vld [vmem:[#allocation5 + $0x150] sm:$0xff]
        %v268 = vld [vmem:[#allocation5 + $0x158] sm:$0xff]
        %v269 = vld [vmem:[#allocation5 + $0x160] sm:$0xff]
        %v270 = vld [vmem:[#allocation5 + $0x168] sm:$0xff]
        %v271 = vld [vmem:[#allocation5 + $0x170] sm:$0xff]
        %v272 = vld [vmem:[#allocation5 + $0x178] sm:$0xff]
        %v273 = vld [vmem:[#allocation5 + $0x180] sm:$0xff]
        %v274 = vld [vmem:[#allocation5 + $0x188] sm:$0xff]
        %v275 = vld [vmem:[#allocation5 + $0x190] sm:$0xff]
        %v276 = vld [vmem:[#allocation5 + $0x198] sm:$0xff]
        %v277 = vld [vmem:[#allocation5 + $0x1a0] sm:$0xff]
        %v278 = vld [vmem:[#allocation5 + $0x1a8] sm:$0xff]
        %v279 = vld [vmem:[#allocation5 + $0x1b0] sm:$0xff]
        %v280 = vld [vmem:[#allocation5 + $0x1b8] sm:$0xff]
        %v281 = vld [vmem:[#allocation5 + $0x1c0] sm:$0xff]
        %v282 = vld [vmem:[#allocation5 + $0x1c8] sm:$0xff]
        %v283 = vld [vmem:[#allocation5 + $0x1d0] sm:$0xff]
        %v284 = vld [vmem:[#allocation5 + $0x1d8] sm:$0xff]
        %v285 = vld [vmem:[#allocation5 + $0x1e0] sm:$0xff]
        %v286 = vld [vmem:[#allocation5 + $0x1e8] sm:$0xff]
        %v287 = vld [vmem:[#allocation5 + $0x1f0] sm:$0xff]
        %v288 = vld [vmem:[#allocation5 + $0x1f8] sm:$0xff]
        %v289 = vld [vmem:[#allocation5 + $0x200] sm:$0xff]
        %v290 = vld [vmem:[#allocation5 + $0x208] sm:$0xff]
        %v291 = vld [vmem:[#allocation5 + $0x210] sm:$0xff]
        %v292 = vld [vmem:[#allocation5 + $0x218] sm:$0xff]
        %v293 = vld [vmem:[#allocation5 + $0x220] sm:$0xff]
        %v294 = vld [vmem:[#allocation5 + $0x228] sm:$0xff]
        %v295 = vld [vmem:[#allocation5 + $0x230] sm:$0xff]
        %v296 = vld [vmem:[#allocation5 + $0x238] sm:$0xff]
        %v297 = vld [vmem:[#allocation5 + $0x240] sm:$0xff]
        %v298 = vld [vmem:[#allocation5 + $0x248] sm:$0xff]
        %v299 = vld [vmem:[#allocation5 + $0x250] sm:$0xff]
        %v300 = vld [vmem:[#allocation5 + $0x258] sm:$0xff]
        %v301 = vld [vmem:[#allocation5 + $0x260] sm:$0xff]
        %v302 = vld [vmem:[#allocation5 + $0x268] sm:$0xff]
        %v303 = vld [vmem:[#allocation5 + $0x270] sm:$0xff]
        %v304 = vld [vmem:[#allocation5 + $0x278] sm:$0xff]
        %v305 = vld [vmem:[#allocation5 + $0x280] sm:$0xff]
        %v306 = vld [vmem:[#allocation5 + $0x288] sm:$0xff]
        %v307 = vld [vmem:[#allocation5 + $0x290] sm:$0xff]
        %v308 = vld [vmem:[#allocation5 + $0x298] sm:$0xff]
        %v309 = vld [vmem:[#allocation5 + $0x2a0] sm:$0xff]
        %v310 = vld [vmem:[#allocation5 + $0x2a8] sm:$0xff]
        %v311 = vld [vmem:[#allocation5 + $0x2b0] sm:$0xff]
        %v312 = vld [vmem:[#allocation5 + $0x2b8] sm:$0xff]
        %v313 = vld [vmem:[#allocation5 + $0x2c0] sm:$0xff]
        %v314 = vld [vmem:[#allocation5 + $0x2c8] sm:$0xff]
        %v315 = vld [vmem:[#allocation5 + $0x2d0] sm:$0xff]
        %v316 = vld [vmem:[#allocation5 + $0x2d8] sm:$0xff]
        %v317 = vld [vmem:[#allocation5 + $0x2e0] sm:$0xff]
        %v318 = vld [vmem:[#allocation5 + $0x2e8] sm:$0xff]
        %v319 = vld [vmem:[#allocation5 + $0x2f0] sm:$0xff]
        %v320 = vld [vmem:[#allocation5 + $0x2f8] sm:$0xff]
        %v321 = vld [vmem:[#allocation5 + $0x300] sm:$0xff]
        %v322 = vld [vmem:[#allocation5 + $0x308] sm:$0xff]
        %v323 = vld [vmem:[#allocation5 + $0x310] sm:$0xff]
        %v324 = vld [vmem:[#allocation5 + $0x318] sm:$0xff]
        %v325 = vld [vmem:[#allocation5 + $0x320] sm:$0xff]
        %v326 = vld [vmem:[#allocation5 + $0x328] sm:$0xff]
        %v327 = vld [vmem:[#allocation5 + $0x330] sm:$0xff]
        %v328 = vld [vmem:[#allocation5 + $0x338] sm:$0xff]
        %v329 = vld [vmem:[#allocation5 + $0x340] sm:$0xff]
        %v330 = vld [vmem:[#allocation5 + $0x348] sm:$0xff]
        %v331 = vld [vmem:[#allocation5 + $0x350] sm:$0xff]
        %v332 = vld [vmem:[#allocation5 + $0x358] sm:$0xff]
        %v333 = vld [vmem:[#allocation5 + $0x360] sm:$0xff]
        %v334 = vld [vmem:[#allocation5 + $0x368] sm:$0xff]
        %v335 = vld [vmem:[#allocation5 + $0x370] sm:$0xff]
        %v336 = vld [vmem:[#allocation5 + $0x378] sm:$0xff]
        %v337 = vld [vmem:[#allocation5 + $0x380] sm:$0xff]
        %v338 = vld [vmem:[#allocation5 + $0x388] sm:$0xff]
        %v339 = vld [vmem:[#allocation5 + $0x390] sm:$0xff]
        %v340 = vld [vmem:[#allocation5 + $0x398] sm:$0xff]
        %v341 = vld [vmem:[#allocation5 + $0x3a0] sm:$0xff]
        %v342 = vld [vmem:[#allocation5 + $0x3a8] sm:$0xff]
        %v343 = vld [vmem:[#allocation5 + $0x3b0] sm:$0xff]
        %v344 = vld [vmem:[#allocation5 + $0x3b8] sm:$0xff]
        %v345 = vld [vmem:[#allocation5 + $0x3c0] sm:$0xff]
        %v346 = vld [vmem:[#allocation5 + $0x3c8] sm:$0xff]
        %v347 = vld [vmem:[#allocation5 + $0x3d0] sm:$0xff]
        %v348 = vld [vmem:[#allocation5 + $0x3d8] sm:$0xff]
        %v349 = vld [vmem:[#allocation5 + $0x3e0] sm:$0xff]
        %v350 = vld [vmem:[#allocation5 + $0x3e8] sm:$0xff]
        %v351 = vld [vmem:[#allocation5 + $0x3f0] sm:$0xff]
        %v352 = vld [vmem:[#allocation5 + $0x3f8] sm:$0xff]
        %v353 = vld [vmem:[#allocation5 + $0x400] sm:$0xff]
        %v354 = vld [vmem:[#allocation5 + $0x408] sm:$0xff]
        %v355 = vld [vmem:[#allocation5 + $0x410] sm:$0xff]
        %v356 = vld [vmem:[#allocation5 + $0x418] sm:$0xff]
        %v357 = vld [vmem:[#allocation5 + $0x420] sm:$0xff]
        %v358 = vld [vmem:[#allocation5 + $0x428] sm:$0xff]
        %v359 = vld [vmem:[#allocation5 + $0x430] sm:$0xff]
        %v360 = vld [vmem:[#allocation5 + $0x438] sm:$0xff]
        %v361 = vld [vmem:[#allocation5 + $0x440] sm:$0xff]
        %v362 = vld [vmem:[#allocation5 + $0x448] sm:$0xff]
        %v363 = vld [vmem:[#allocation5 + $0x450] sm:$0xff]
        %v364 = vld [vmem:[#allocation5 + $0x458] sm:$0xff]
        %v365 = vld [vmem:[#allocation5 + $0x460] sm:$0xff]
        %v366 = vld [vmem:[#allocation5 + $0x468] sm:$0xff]
        %v367 = vld [vmem:[#allocation5 + $0x470] sm:$0xff]
        %v368 = vld [vmem:[#allocation5 + $0x478] sm:$0xff]
        %v369 = vld [vmem:[#allocation5 + $0x480] sm:$0xff]
        %v370 = vld [vmem:[#allocation5 + $0x488] sm:$0xff]
        %v371 = vld [vmem:[#allocation5 + $0x490] sm:$0xff]
        %v372 = vld [vmem:[#allocation5 + $0x498] sm:$0xff]
        %v373 = vld [vmem:[#allocation5 + $0x4a0] sm:$0xff]
        %v374 = vld [vmem:[#allocation5 + $0x4a8] sm:$0xff]
        %v375 = vld [vmem:[#allocation5 + $0x4b0] sm:$0xff]
        %v376 = vld [vmem:[#allocation5 + $0x4b8] sm:$0xff]
        %v377 = vld [vmem:[#allocation5 + $0x4c0] sm:$0xff]
        %v378 = vld [vmem:[#allocation5 + $0x4c8] sm:$0xff]
        %v379 = vld [vmem:[#allocation5 + $0x4d0] sm:$0xff]
        %v380 = vld [vmem:[#allocation5 + $0x4d8] sm:$0xff]
        %v381 = vld [vmem:[#allocation5 + $0x4e0] sm:$0xff]
        %v382 = vld [vmem:[#allocation5 + $0x4e8] sm:$0xff]
        %v383 = vld [vmem:[#allocation5 + $0x4f0] sm:$0xff]
        %v384 = vld [vmem:[#allocation5 + $0x4f8] sm:$0xff]
        %v385 = vld [vmem:[#allocation5 + $0x500] sm:$0xff]
        %v386 = vld [vmem:[#allocation5 + $0x508] sm:$0xff]
        %v387 = vld [vmem:[#allocation5 + $0x510] sm:$0xff]
        %v388 = vld [vmem:[#allocation5 + $0x518] sm:$0xff]
        %v389 = vld [vmem:[#allocation5 + $0x520] sm:$0xff]
        %v390 = vld [vmem:[#allocation5 + $0x528] sm:$0xff]
        %v391 = vld [vmem:[#allocation5 + $0x530] sm:$0xff]
        %v392 = vld [vmem:[#allocation5 + $0x538] sm:$0xff]
        %v393 = vld [vmem:[#allocation5 + $0x540] sm:$0xff]
        %v394 = vld [vmem:[#allocation5 + $0x548] sm:$0xff]
        %v395 = vld [vmem:[#allocation5 + $0x550] sm:$0xff]
        %v396 = vld [vmem:[#allocation5 + $0x558] sm:$0xff]
        %v397 = vld [vmem:[#allocation5 + $0x560] sm:$0xff]
        %v398 = vld [vmem:[#allocation5 + $0x568] sm:$0xff]
        %v399 = vld [vmem:[#allocation5 + $0x570] sm:$0xff]
        %v400 = vld [vmem:[#allocation5 + $0x578] sm:$0xff]
        %v401 = vld [vmem:[#allocation5 + $0x580] sm:$0xff]
        %v402 = vld [vmem:[#allocation5 + $0x588] sm:$0xff]
        %v403 = vld [vmem:[#allocation5 + $0x590] sm:$0xff]
        %v404 = vld [vmem:[#allocation5 + $0x598] sm:$0xff]
        %v405 = vld [vmem:[#allocation5 + $0x5a0] sm:$0xff]
        %v406 = vld [vmem:[#allocation5 + $0x5a8] sm:$0xff]
        %v407 = vld [vmem:[#allocation5 + $0x5b0] sm:$0xff]
        %v408 = vld [vmem:[#allocation5 + $0x5b8] sm:$0xff]
        %v409 = vld [vmem:[#allocation5 + $0x5c0] sm:$0xff]
        %v410 = vld [vmem:[#allocation5 + $0x5c8] sm:$0xff]
        %v411 = vld [vmem:[#allocation5 + $0x5d0] sm:$0xff]
        %v412 = vld [vmem:[#allocation5 + $0x5d8] sm:$0xff]
        %v413 = vld [vmem:[#allocation5 + $0x5e0] sm:$0xff]
        %v414 = vld [vmem:[#allocation5 + $0x5e8] sm:$0xff]
        %v415 = vld [vmem:[#allocation5 + $0x5f0] sm:$0xff]
        %v416 = vld [vmem:[#allocation5 + $0x5f8] sm:$0xff]
        %v417 = vld [vmem:[#allocation5 + $0x600] sm:$0xff]
        %v418 = vld [vmem:[#allocation5 + $0x608] sm:$0xff]
        %v419 = vld [vmem:[#allocation5 + $0x610] sm:$0xff]
        %v420 = vld [vmem:[#allocation5 + $0x618] sm:$0xff]
        %v421 = vld [vmem:[#allocation5 + $0x620] sm:$0xff]
        %v422 = vld [vmem:[#allocation5 + $0x628] sm:$0xff]
        %v423 = vld [vmem:[#allocation5 + $0x630] sm:$0xff]
        %v424 = vld [vmem:[#allocation5 + $0x638] sm:$0xff]
        %v425 = vld [vmem:[#allocation5 + $0x640] sm:$0xff]
        %v426 = vld [vmem:[#allocation5 + $0x648] sm:$0xff]
        %v427 = vld [vmem:[#allocation5 + $0x650] sm:$0xff]
        %v428 = vld [vmem:[#allocation5 + $0x658] sm:$0xff]
        %v429 = vld [vmem:[#allocation5 + $0x660] sm:$0xff]
        %v430 = vld [vmem:[#allocation5 + $0x668] sm:$0xff]
        %v431 = vld [vmem:[#allocation5 + $0x670] sm:$0xff]
        %v432 = vld [vmem:[#allocation5 + $0x678] sm:$0xff]
        %v433 = vld [vmem:[#allocation5 + $0x680] sm:$0xff]
        %v434 = vld [vmem:[#allocation5 + $0x688] sm:$0xff]
        %v435 = vld [vmem:[#allocation5 + $0x690] sm:$0xff]
        %v436 = vld [vmem:[#allocation5 + $0x698] sm:$0xff]
        %v437 = vld [vmem:[#allocation5 + $0x6a0] sm:$0xff]
        %v438 = vld [vmem:[#allocation5 + $0x6a8] sm:$0xff]
        %v439 = vld [vmem:[#allocation5 + $0x6b0] sm:$0xff]
        %v440 = vld [vmem:[#allocation5 + $0x6b8] sm:$0xff]
        %v441 = vld [vmem:[#allocation5 + $0x6c0] sm:$0xff]
        %v442 = vld [vmem:[#allocation5 + $0x6c8] sm:$0xff]
        %v443 = vld [vmem:[#allocation5 + $0x6d0] sm:$0xff]
        %v444 = vld [vmem:[#allocation5 + $0x6d8] sm:$0xff]
        %v445 = vld [vmem:[#allocation5 + $0x6e0] sm:$0xff]
        %v446 = vld [vmem:[#allocation5 + $0x6e8] sm:$0xff]
        %v447 = vld [vmem:[#allocation5 + $0x6f0] sm:$0xff]
        %v448 = vld [vmem:[#allocation5 + $0x6f8] sm:$0xff]
        %v449 = vld [vmem:[#allocation5 + $0x700] sm:$0xff]
        %v450 = vld [vmem:[#allocation5 + $0x708] sm:$0xff]
        %v451 = vld [vmem:[#allocation5 + $0x710] sm:$0xff]
        %v452 = vld [vmem:[#allocation5 + $0x718] sm:$0xff]
        %v453 = vld [vmem:[#allocation5 + $0x720] sm:$0xff]
        %v454 = vld [vmem:[#allocation5 + $0x728] sm:$0xff]
        %v455 = vld [vmem:[#allocation5 + $0x730] sm:$0xff]
        %v456 = vld [vmem:[#allocation5 + $0x738] sm:$0xff]
        %v457 = vld [vmem:[#allocation5 + $0x740] sm:$0xff]
        %v458 = vld [vmem:[#allocation5 + $0x748] sm:$0xff]
        %v459 = vld [vmem:[#allocation5 + $0x750] sm:$0xff]
        %v460 = vld [vmem:[#allocation5 + $0x758] sm:$0xff]
        %v461 = vld [vmem:[#allocation5 + $0x760] sm:$0xff]
        %v462 = vld [vmem:[#allocation5 + $0x768] sm:$0xff]
        %v463 = vld [vmem:[#allocation5 + $0x770] sm:$0xff]
        %v464 = vld [vmem:[#allocation5 + $0x778] sm:$0xff]
        %v465 = vld [vmem:[#allocation5 + $0x780] sm:$0xff]
        %v466 = vld [vmem:[#allocation5 + $0x788] sm:$0xff]
        %v467 = vld [vmem:[#allocation5 + $0x790] sm:$0xff]
        %v468 = vld [vmem:[#allocation5 + $0x798] sm:$0xff]
        %v469 = vld [vmem:[#allocation5 + $0x7a0] sm:$0xff]
        %v470 = vld [vmem:[#allocation5 + $0x7a8] sm:$0xff]
        %v471 = vld [vmem:[#allocation5 + $0x7b0] sm:$0xff]
        %v472 = vld [vmem:[#allocation5 + $0x7b8] sm:$0xff]
        %v473 = vld [vmem:[#allocation5 + $0x7c0] sm:$0xff]
        %v474 = vld [vmem:[#allocation5 + $0x7c8] sm:$0xff]
        %v475 = vld [vmem:[#allocation5 + $0x7d0] sm:$0xff]
        %v476 = vld [vmem:[#allocation5 + $0x7d8] sm:$0xff]
        %v477 = vld [vmem:[#allocation5 + $0x7e0] sm:$0xff]
        %v478 = vld [vmem:[#allocation5 + $0x7e8] sm:$0xff]
        %v479 = vld [vmem:[#allocation5 + $0x7f0] sm:$0xff]
        %v480 = vld [vmem:[#allocation5 + $0x7f8] sm:$0xff]
        %481 = vmatprep.subr.mxu0 %v346
        %482 = vmatpush1.msra.mxu0 %v345
        %483 = vmatprep.subr.mxu0 %v338
        %484 = vmatpush1.msra.mxu0 %v337
        %485 = vmatprep.subr.mxu0 %v330
        %486 = vmatpush1.msra.mxu0 %v329
        %487 = vmatprep.subr.mxu0 %v322
        %488 = vmatpush1.msra.mxu0 %v321
        %489 = vmatprep.subr.mxu0 %v314
        %490 = vmatpush1.msra.mxu0 %v313
        %491 = vmatprep.subr.mxu0 %v306
        %492 = vmatpush1.msra.mxu0 %v305
        %493 = vmatprep.subr.mxu0 %v298
        %494 = vmatpush1.msra.mxu0 %v297
        %495 = vmatprep.subr.mxu0 %v290
        %496 = vmatpush1.msra.mxu0 %v289
        %497 = vmatprep.subr.mxu0 %v282
        %498 = vmatpush1.msra.mxu0 %v281
        %499 = vmatprep.subr.mxu0 %v274
        %500 = vmatpush1.msra.mxu0 %v273
        %501 = vmatprep.subr.mxu0 %v266
        %502 = vmatpush1.msra.mxu0 %v265
        %503 = vmatprep.subr.mxu0 %v258
        %504 = vmatpush1.msra.mxu0 %v257
        %505 = vmatprep.subr.mxu0 %v250
        %506 = vmatpush1.msra.mxu0 %v249
        %507 = vmatprep.subr.mxu0 %v242
        %508 = vmatpush1.msra.mxu0 %v241
        %509 = vmatprep.subr.mxu0 %v234
        %510 = vmatpush1.msra.mxu0 %v233
        %511 = vmatprep.subr.mxu0 %v226
        %512 = vmatpush1.msra.mxu0 %v225
        %513 = vmatprep.subr.mxu0 %v474
        %514 = vmatpush2.msra.mxu0 %v473
        %515 = vmatprep.subr.mxu0 %v466
        %516 = vmatpush2.msra.mxu0 %v465
        %517 = vmatprep.subr.mxu0 %v458
        %518 = vmatpush2.msra.mxu0 %v457
        %519 = vmatprep.subr.mxu0 %v450
        %520 = vmatpush2.msra.mxu0 %v449
        %521 = vmatprep.subr.mxu0 %v442
        %522 = vmatpush2.msra.mxu0 %v441
        %523 = vmatprep.subr.mxu0 %v434
        %524 = vmatpush2.msra.mxu0 %v433
        %525 = vmatprep.subr.mxu0 %v426
        %526 = vmatpush2.msra.mxu0 %v425
        %527 = vmatprep.subr.mxu0 %v418
        %528 = vmatpush2.msra.mxu0 %v417
        %529 = vmatprep.subr.mxu0 %v410
        %530 = vmatpush2.msra.mxu0 %v409
        %531 = vmatprep.subr.mxu0 %v402
        %532 = vmatpush2.msra.mxu0 %v401
        %533 = vmatprep.subr.mxu0 %v394
        %534 = vmatpush2.msra.mxu0 %v393
        %535 = vmatprep.subr.mxu0 %v386
        %536 = vmatpush2.msra.mxu0 %v385
        %537 = vmatprep.subr.mxu0 %v378
        %538 = vmatpush2.msra.mxu0 %v377
        %539 = vmatprep.subr.mxu0 %v370
        %540 = vmatpush2.msra.mxu0 %v369
        %541 = vmatprep.subr.mxu0 %v362
        %542 = vmatpush2.msra.mxu0 %v361
        %543 = vmatprep.subr.mxu0 %v354
        %544 = vmatpush2.msra.mxu0 %v353
        %545 = vmatprep.mubr.f32.mxu0 %v222
        %546 = vmatmul.mubr.f32.gmra.mxu0 %v221
        %v547 = vpop.f32.mrf.mxu0
        %v548 = vadd.f32 0.0, %v547
        %v549 = vpop.f32.mrf.mxu0
        %v550 = vadd.f32 0.0, %v549
        %551 = vmatprep.mubr.f32.mxu0 %v224
        %552 = vmatmul.mubr.f32.gmra.mxu0 %v223
        %v553 = vpop.f32.mrf.mxu0
        %v554 = vadd.f32 0.0, %v553
        %v555 = vpop.f32.mrf.mxu0
        %v556 = vadd.f32 0.0, %v555
        %557 = vdwg.mxu0
        %558 = vmatprep.subr.mxu0 %v348
        %559 = vmatpush1.msra.mxu0 %v347
        %560 = vmatprep.subr.mxu0 %v340
        %561 = vmatpush1.msra.mxu0 %v339
        %562 = vmatprep.subr.mxu0 %v332
        %563 = vmatpush1.msra.mxu0 %v331
        %564 = vmatprep.subr.mxu0 %v324
        %565 = vmatpush1.msra.mxu0 %v323
        %566 = vmatprep.subr.mxu0 %v316
        %567 = vmatpush1.msra.mxu0 %v315
        %568 = vmatprep.subr.mxu0 %v308
        %569 = vmatpush1.msra.mxu0 %v307
        %570 = vmatprep.subr.mxu0 %v300
        %571 = vmatpush1.msra.mxu0 %v299
        %572 = vmatprep.subr.mxu0 %v292
        %573 = vmatpush1.msra.mxu0 %v291
        %574 = vmatprep.subr.mxu0 %v284
        %575 = vmatpush1.msra.mxu0 %v283
        %576 = vmatprep.subr.mxu0 %v276
        %577 = vmatpush1.msra.mxu0 %v275
        %578 = vmatprep.subr.mxu0 %v268
        %579 = vmatpush1.msra.mxu0 %v267
        %580 = vmatprep.subr.mxu0 %v260
        %581 = vmatpush1.msra.mxu0 %v259
        %582 = vmatprep.subr.mxu0 %v252
        %583 = vmatpush1.msra.mxu0 %v251
        %584 = vmatprep.subr.mxu0 %v244
        %585 = vmatpush1.msra.mxu0 %v243
        %586 = vmatprep.subr.mxu0 %v236
        %587 = vmatpush1.msra.mxu0 %v235
        %588 = vmatprep.subr.mxu0 %v228
        %589 = vmatpush1.msra.mxu0 %v227
        %590 = vmatprep.subr.mxu0 %v476
        %591 = vmatpush2.msra.mxu0 %v475
        %592 = vmatprep.subr.mxu0 %v468
        %593 = vmatpush2.msra.mxu0 %v467
        %594 = vmatprep.subr.mxu0 %v460
        %595 = vmatpush2.msra.mxu0 %v459
        %596 = vmatprep.subr.mxu0 %v452
        %597 = vmatpush2.msra.mxu0 %v451
        %598 = vmatprep.subr.mxu0 %v444
        %599 = vmatpush2.msra.mxu0 %v443
        %600 = vmatprep.subr.mxu0 %v436
        %601 = vmatpush2.msra.mxu0 %v435
        %602 = vmatprep.subr.mxu0 %v428
        %603 = vmatpush2.msra.mxu0 %v427
        %604 = vmatprep.subr.mxu0 %v420
        %605 = vmatpush2.msra.mxu0 %v419
        %606 = vmatprep.subr.mxu0 %v412
        %607 = vmatpush2.msra.mxu0 %v411
        %608 = vmatprep.subr.mxu0 %v404
        %609 = vmatpush2.msra.mxu0 %v403
        %610 = vmatprep.subr.mxu0 %v396
        %611 = vmatpush2.msra.mxu0 %v395
        %612 = vmatprep.subr.mxu0 %v388
        %613 = vmatpush2.msra.mxu0 %v387
        %614 = vmatprep.subr.mxu0 %v380
        %615 = vmatpush2.msra.mxu0 %v379
        %616 = vmatprep.subr.mxu0 %v372
        %617 = vmatpush2.msra.mxu0 %v371
        %618 = vmatprep.subr.mxu0 %v364
        %619 = vmatpush2.msra.mxu0 %v363
        %620 = vmatprep.subr.mxu0 %v356
        %621 = vmatpush2.msra.mxu0 %v355
        %622 = vmatprep.mubr.f32.mxu0 %v222
        %623 = vmatmul.mubr.f32.gmra.mxu0 %v221
        %v624 = vpop.f32.mrf.mxu0
        %v625 = vadd.f32 0.0, %v624
        %v626 = vpop.f32.mrf.mxu0
        %v627 = vadd.f32 0.0, %v626
        %628 = vmatprep.mubr.f32.mxu0 %v224
        %629 = vmatmul.mubr.f32.gmra.mxu0 %v223
        %v630 = vpop.f32.mrf.mxu0
        %v631 = vadd.f32 0.0, %v630
        %v632 = vpop.f32.mrf.mxu0
        %v633 = vadd.f32 0.0, %v632
        %634 = vdwg.mxu0
        %635 = vmatprep.subr.mxu0 %v350
        %636 = vmatpush1.msra.mxu0 %v349
        %637 = vmatprep.subr.mxu0 %v342
        %638 = vmatpush1.msra.mxu0 %v341
        %639 = vmatprep.subr.mxu0 %v334
        %640 = vmatpush1.msra.mxu0 %v333
        %641 = vmatprep.subr.mxu0 %v326
        %642 = vmatpush1.msra.mxu0 %v325
        %643 = vmatprep.subr.mxu0 %v318
        %644 = vmatpush1.msra.mxu0 %v317
        %645 = vmatprep.subr.mxu0 %v310
        %646 = vmatpush1.msra.mxu0 %v309
        %647 = vmatprep.subr.mxu0 %v302
        %648 = vmatpush1.msra.mxu0 %v301
        %649 = vmatprep.subr.mxu0 %v294
        %650 = vmatpush1.msra.mxu0 %v293
        %651 = vmatprep.subr.mxu0 %v286
        %652 = vmatpush1.msra.mxu0 %v285
        %653 = vmatprep.subr.mxu0 %v278
        %654 = vmatpush1.msra.mxu0 %v277
        %655 = vmatprep.subr.mxu0 %v270
        %656 = vmatpush1.msra.mxu0 %v269
        %657 = vmatprep.subr.mxu0 %v262
        %658 = vmatpush1.msra.mxu0 %v261
        %659 = vmatprep.subr.mxu0 %v254
        %660 = vmatpush1.msra.mxu0 %v253
        %661 = vmatprep.subr.mxu0 %v246
        %662 = vmatpush1.msra.mxu0 %v245
        %663 = vmatprep.subr.mxu0 %v238
        %664 = vmatpush1.msra.mxu0 %v237
        %665 = vmatprep.subr.mxu0 %v230
        %666 = vmatpush1.msra.mxu0 %v229
        %667 = vmatprep.subr.mxu0 %v478
        %668 = vmatpush2.msra.mxu0 %v477
        %669 = vmatprep.subr.mxu0 %v470
        %670 = vmatpush2.msra.mxu0 %v469
        %671 = vmatprep.subr.mxu0 %v462
        %672 = vmatpush2.msra.mxu0 %v461
        %673 = vmatprep.subr.mxu0 %v454
        %674 = vmatpush2.msra.mxu0 %v453
        %675 = vmatprep.subr.mxu0 %v446
        %676 = vmatpush2.msra.mxu0 %v445
        %677 = vmatprep.subr.mxu0 %v438
        %678 = vmatpush2.msra.mxu0 %v437
        %679 = vmatprep.subr.mxu0 %v430
        %680 = vmatpush2.msra.mxu0 %v429
        %681 = vmatprep.subr.mxu0 %v422
        %682 = vmatpush2.msra.mxu0 %v421
        %683 = vmatprep.subr.mxu0 %v414
        %684 = vmatpush2.msra.mxu0 %v413
        %685 = vmatprep.subr.mxu0 %v406
        %686 = vmatpush2.msra.mxu0 %v405
        %687 = vmatprep.subr.mxu0 %v398
        %688 = vmatpush2.msra.mxu0 %v397
        %689 = vmatprep.subr.mxu0 %v390
        %690 = vmatpush2.msra.mxu0 %v389
        %691 = vmatprep.subr.mxu0 %v382
        %692 = vmatpush2.msra.mxu0 %v381
        %693 = vmatprep.subr.mxu0 %v374
        %694 = vmatpush2.msra.mxu0 %v373
        %695 = vmatprep.subr.mxu0 %v366
        %696 = vmatpush2.msra.mxu0 %v365
        %697 = vmatprep.subr.mxu0 %v358
        %698 = vmatpush2.msra.mxu0 %v357
        %699 = vmatprep.mubr.f32.mxu0 %v222
        %700 = vmatmul.mubr.f32.gmra.mxu0 %v221
        %v701 = vpop.f32.mrf.mxu0
        %v702 = vadd.f32 0.0, %v701
        %v703 = vpop.f32.mrf.mxu0
        %v704 = vadd.f32 0.0, %v703
        %705 = vmatprep.mubr.f32.mxu0 %v224
        %706 = vmatmul.mubr.f32.gmra.mxu0 %v223
        %v707 = vpop.f32.mrf.mxu0
        %v708 = vadd.f32 0.0, %v707
        %v709 = vpop.f32.mrf.mxu0
        %v710 = vadd.f32 0.0, %v709
        %711 = vdwg.mxu0
        %712 = vmatprep.subr.mxu0 %v352
        %713 = vmatpush1.msra.mxu0 %v351
        %714 = vmatprep.subr.mxu0 %v344
        %715 = vmatpush1.msra.mxu0 %v343
        %716 = vmatprep.subr.mxu0 %v336
        %717 = vmatpush1.msra.mxu0 %v335
        %718 = vmatprep.subr.mxu0 %v328
        %719 = vmatpush1.msra.mxu0 %v327
        %720 = vmatprep.subr.mxu0 %v320
        %721 = vmatpush1.msra.mxu0 %v319
        %722 = vmatprep.subr.mxu0 %v312
        %723 = vmatpush1.msra.mxu0 %v311
        %724 = vmatprep.subr.mxu0 %v304
        %725 = vmatpush1.msra.mxu0 %v303
        %726 = vmatprep.subr.mxu0 %v296
        %727 = vmatpush1.msra.mxu0 %v295
        %728 = vmatprep.subr.mxu0 %v288
        %729 = vmatpush1.msra.mxu0 %v287
        %730 = vmatprep.subr.mxu0 %v280
        %731 = vmatpush1.msra.mxu0 %v279
        %732 = vmatprep.subr.mxu0 %v272
        %733 = vmatpush1.msra.mxu0 %v271
        %734 = vmatprep.subr.mxu0 %v264
        %735 = vmatpush1.msra.mxu0 %v263
        %736 = vmatprep.subr.mxu0 %v256
        %737 = vmatpush1.msra.mxu0 %v255
        %738 = vmatprep.subr.mxu0 %v248
        %739 = vmatpush1.msra.mxu0 %v247
        %740 = vmatprep.subr.mxu0 %v240
        %741 = vmatpush1.msra.mxu0 %v239
        %742 = vmatprep.subr.mxu0 %v232
        %743 = vmatpush1.msra.mxu0 %v231
        %744 = vmatprep.subr.mxu0 %v480
        %745 = vmatpush2.msra.mxu0 %v479
        %746 = vmatprep.subr.mxu0 %v472
        %747 = vmatpush2.msra.mxu0 %v471
        %748 = vmatprep.subr.mxu0 %v464
        %749 = vmatpush2.msra.mxu0 %v463
        %750 = vmatprep.subr.mxu0 %v456
        %751 = vmatpush2.msra.mxu0 %v455
        %752 = vmatprep.subr.mxu0 %v448
        %753 = vmatpush2.msra.mxu0 %v447
        %754 = vmatprep.subr.mxu0 %v440
        %755 = vmatpush2.msra.mxu0 %v439
        %756 = vmatprep.subr.mxu0 %v432
        %757 = vmatpush2.msra.mxu0 %v431
        %758 = vmatprep.subr.mxu0 %v424
        %759 = vmatpush2.msra.mxu0 %v423
        %760 = vmatprep.subr.mxu0 %v416
        %761 = vmatpush2.msra.mxu0 %v415
        %762 = vmatprep.subr.mxu0 %v408
        %763 = vmatpush2.msra.mxu0 %v407
        %764 = vmatprep.subr.mxu0 %v400
        %765 = vmatpush2.msra.mxu0 %v399
        %766 = vmatprep.subr.mxu0 %v392
        %767 = vmatpush2.msra.mxu0 %v391
        %768 = vmatprep.subr.mxu0 %v384
        %769 = vmatpush2.msra.mxu0 %v383
        %770 = vmatprep.subr.mxu0 %v376
        %771 = vmatpush2.msra.mxu0 %v375
        %772 = vmatprep.subr.mxu0 %v368
        %773 = vmatpush2.msra.mxu0 %v367
        %774 = vmatprep.subr.mxu0 %v360
        %775 = vmatpush2.msra.mxu0 %v359
        %776 = vmatprep.mubr.f32.mxu0 %v222
        %777 = vmatmul.mubr.f32.gmra.mxu0 %v221
        %v778 = vpop.f32.mrf.mxu0
        %v779 = vadd.f32 0.0, %v778
        %v780 = vpop.f32.mrf.mxu0
        %v781 = vadd.f32 0.0, %v780
        %782 = vmatprep.mubr.f32.mxu0 %v224
        %783 = vmatmul.mubr.f32.gmra.mxu0 %v223
        %v784 = vpop.f32.mrf.mxu0
        %v785 = vadd.f32 0.0, %v784
        %v786 = vpop.f32.mrf.mxu0
        %v787 = vadd.f32 0.0, %v786
        %788 = vdwg.mxu0
        %v789 = vxor.u32 %v548, 2147483648
        %v790 = vxor.u32 %v550, 2147483648
        %v791 = vxor.u32 %v625, 2147483648
        %v792 = vxor.u32 %v627, 2147483648
        %v793 = vxor.u32 %v554, 2147483648
        %v794 = vxor.u32 %v556, 2147483648
        %v795 = vxor.u32 %v631, 2147483648
        %v796 = vxor.u32 %v633, 2147483648
        %v797 = vmul.f32 %v789, 1.442695
        %v798 = vpow.pop %v797
        %v799 = vmul.f32 %v790, 1.442695
        %v800 = vpow.pop %v799
        %v801 = vmul.f32 %v791, 1.442695
        %v802 = vpow.pop %v801
        %v803 = vmul.f32 %v792, 1.442695
        %v804 = vpow.pop %v803
        %v805 = vmul.f32 %v793, 1.442695
        %v806 = vpow.pop %v805
        %v807 = vmul.f32 %v794, 1.442695
        %v808 = vpow.pop %v807
        %v809 = vmul.f32 %v795, 1.442695
        %v810 = vpow.pop %v809
        %v811 = vmul.f32 %v796, 1.442695
        %v812 = vpow.pop %v811
        %v813 = vadd.f32 %v798, 1.0
        %v814 = vadd.f32 %v800, 1.0
        %v815 = vadd.f32 %v802, 1.0
        %v816 = vadd.f32 %v804, 1.0
        %v817 = vadd.f32 %v806, 1.0
        %v818 = vadd.f32 %v808, 1.0
        %v819 = vadd.f32 %v810, 1.0
        %v820 = vadd.f32 %v812, 1.0
        %v821 = vrcp.pop %v813
        %v822 = vmul.f32 1.0, %v821
        %v823 = vrcp.pop %v814
        %v824 = vmul.f32 1.0, %v823
        %v825 = vrcp.pop %v815
        %v826 = vmul.f32 1.0, %v825
        %v827 = vrcp.pop %v816
        %v828 = vmul.f32 1.0, %v827
        %v829 = vrcp.pop %v817
        %v830 = vmul.f32 1.0, %v829
        %v831 = vrcp.pop %v818
        %v832 = vmul.f32 1.0, %v831
        %v833 = vrcp.pop %v819
        %v834 = vmul.f32 1.0, %v833
        %v835 = vrcp.pop %v820
        %v836 = vmul.f32 1.0, %v835
        %v837 = vmul.f32 %v548, %v822
        %v838 = vmul.f32 %v550, %v824
        %v839 = vmul.f32 %v625, %v826
        %v840 = vmul.f32 %v627, %v828
        %v841 = vmul.f32 %v554, %v830
        %v842 = vmul.f32 %v556, %v832
        %v843 = vmul.f32 %v631, %v834
        %v844 = vmul.f32 %v633, %v836
        %v845 = vmul.f32 %v837, %v702
        %v846 = vmul.f32 %v838, %v704
        %v847 = vmul.f32 %v839, %v779
        %v848 = vmul.f32 %v840, %v781
        %v849 = vmul.f32 %v841, %v708
        %v850 = vmul.f32 %v842, %v710
        %v851 = vmul.f32 %v843, %v785
        %v852 = vmul.f32 %v844, %v787
        %v853 = vld [vmem:[#allocation7] sm:$0xff]
        %v854 = vld [vmem:[#allocation7 + $0x8] sm:$0xff]
        %v855 = vld [vmem:[#allocation7 + $0x10] sm:$0xff]
        %v856 = vld [vmem:[#allocation7 + $0x18] sm:$0xff]
        %v857 = vld [vmem:[#allocation7 + $0x20] sm:$0xff]
        %v858 = vld [vmem:[#allocation7 + $0x28] sm:$0xff]
        %v859 = vld [vmem:[#allocation7 + $0x30] sm:$0xff]
        %v860 = vld [vmem:[#allocation7 + $0x38] sm:$0xff]
        %v861 = vld [vmem:[#allocation7 + $0x40] sm:$0xff]
        %v862 = vld [vmem:[#allocation7 + $0x48] sm:$0xff]
        %v863 = vld [vmem:[#allocation7 + $0x50] sm:$0xff]
        %v864 = vld [vmem:[#allocation7 + $0x58] sm:$0xff]
        %v865 = vld [vmem:[#allocation7 + $0x60] sm:$0xff]
        %v866 = vld [vmem:[#allocation7 + $0x68] sm:$0xff]
        %v867 = vld [vmem:[#allocation7 + $0x70] sm:$0xff]
        %v868 = vld [vmem:[#allocation7 + $0x78] sm:$0xff]
        %v869 = vld [vmem:[#allocation7 + $0x80] sm:$0xff]
        %v870 = vld [vmem:[#allocation7 + $0x88] sm:$0xff]
        %v871 = vld [vmem:[#allocation7 + $0x90] sm:$0xff]
        %v872 = vld [vmem:[#allocation7 + $0x98] sm:$0xff]
        %v873 = vld [vmem:[#allocation7 + $0xa0] sm:$0xff]
        %v874 = vld [vmem:[#allocation7 + $0xa8] sm:$0xff]
        %v875 = vld [vmem:[#allocation7 + $0xb0] sm:$0xff]
        %v876 = vld [vmem:[#allocation7 + $0xb8] sm:$0xff]
        %v877 = vld [vmem:[#allocation7 + $0xc0] sm:$0xff]
        %v878 = vld [vmem:[#allocation7 + $0xc8] sm:$0xff]
        %v879 = vld [vmem:[#allocation7 + $0xd0] sm:$0xff]
        %v880 = vld [vmem:[#allocation7 + $0xd8] sm:$0xff]
        %v881 = vld [vmem:[#allocation7 + $0xe0] sm:$0xff]
        %v882 = vld [vmem:[#allocation7 + $0xe8] sm:$0xff]
        %v883 = vld [vmem:[#allocation7 + $0xf0] sm:$0xff]
        %v884 = vld [vmem:[#allocation7 + $0xf8] sm:$0xff]
        %v885 = vld [vmem:[#allocation7 + $0x100] sm:$0xff]
        %v886 = vld [vmem:[#allocation7 + $0x108] sm:$0xff]
        %v887 = vld [vmem:[#allocation7 + $0x110] sm:$0xff]
        %v888 = vld [vmem:[#allocation7 + $0x118] sm:$0xff]
        %v889 = vld [vmem:[#allocation7 + $0x120] sm:$0xff]
        %v890 = vld [vmem:[#allocation7 + $0x128] sm:$0xff]
        %v891 = vld [vmem:[#allocation7 + $0x130] sm:$0xff]
        %v892 = vld [vmem:[#allocation7 + $0x138] sm:$0xff]
        %v893 = vld [vmem:[#allocation7 + $0x140] sm:$0xff]
        %v894 = vld [vmem:[#allocation7 + $0x148] sm:$0xff]
        %v895 = vld [vmem:[#allocation7 + $0x150] sm:$0xff]
        %v896 = vld [vmem:[#allocation7 + $0x158] sm:$0xff]
        %v897 = vld [vmem:[#allocation7 + $0x160] sm:$0xff]
        %v898 = vld [vmem:[#allocation7 + $0x168] sm:$0xff]
        %v899 = vld [vmem:[#allocation7 + $0x170] sm:$0xff]
        %v900 = vld [vmem:[#allocation7 + $0x178] sm:$0xff]
        %v901 = vld [vmem:[#allocation7 + $0x180] sm:$0xff]
        %v902 = vld [vmem:[#allocation7 + $0x188] sm:$0xff]
        %v903 = vld [vmem:[#allocation7 + $0x190] sm:$0xff]
        %v904 = vld [vmem:[#allocation7 + $0x198] sm:$0xff]
        %v905 = vld [vmem:[#allocation7 + $0x1a0] sm:$0xff]
        %v906 = vld [vmem:[#allocation7 + $0x1a8] sm:$0xff]
        %v907 = vld [vmem:[#allocation7 + $0x1b0] sm:$0xff]
        %v908 = vld [vmem:[#allocation7 + $0x1b8] sm:$0xff]
        %v909 = vld [vmem:[#allocation7 + $0x1c0] sm:$0xff]
        %v910 = vld [vmem:[#allocation7 + $0x1c8] sm:$0xff]
        %v911 = vld [vmem:[#allocation7 + $0x1d0] sm:$0xff]
        %v912 = vld [vmem:[#allocation7 + $0x1d8] sm:$0xff]
        %v913 = vld [vmem:[#allocation7 + $0x1e0] sm:$0xff]
        %v914 = vld [vmem:[#allocation7 + $0x1e8] sm:$0xff]
        %v915 = vld [vmem:[#allocation7 + $0x1f0] sm:$0xff]
        %v916 = vld [vmem:[#allocation7 + $0x1f8] sm:$0xff]
        %v917 = vld [vmem:[#allocation7 + $0x200] sm:$0xff]
        %v918 = vld [vmem:[#allocation7 + $0x208] sm:$0xff]
        %v919 = vld [vmem:[#allocation7 + $0x210] sm:$0xff]
        %v920 = vld [vmem:[#allocation7 + $0x218] sm:$0xff]
        %v921 = vld [vmem:[#allocation7 + $0x220] sm:$0xff]
        %v922 = vld [vmem:[#allocation7 + $0x228] sm:$0xff]
        %v923 = vld [vmem:[#allocation7 + $0x230] sm:$0xff]
        %v924 = vld [vmem:[#allocation7 + $0x238] sm:$0xff]
        %v925 = vld [vmem:[#allocation7 + $0x240] sm:$0xff]
        %v926 = vld [vmem:[#allocation7 + $0x248] sm:$0xff]
        %v927 = vld [vmem:[#allocation7 + $0x250] sm:$0xff]
        %v928 = vld [vmem:[#allocation7 + $0x258] sm:$0xff]
        %v929 = vld [vmem:[#allocation7 + $0x260] sm:$0xff]
        %v930 = vld [vmem:[#allocation7 + $0x268] sm:$0xff]
        %v931 = vld [vmem:[#allocation7 + $0x270] sm:$0xff]
        %v932 = vld [vmem:[#allocation7 + $0x278] sm:$0xff]
        %v933 = vld [vmem:[#allocation7 + $0x280] sm:$0xff]
        %v934 = vld [vmem:[#allocation7 + $0x288] sm:$0xff]
        %v935 = vld [vmem:[#allocation7 + $0x290] sm:$0xff]
        %v936 = vld [vmem:[#allocation7 + $0x298] sm:$0xff]
        %v937 = vld [vmem:[#allocation7 + $0x2a0] sm:$0xff]
        %v938 = vld [vmem:[#allocation7 + $0x2a8] sm:$0xff]
        %v939 = vld [vmem:[#allocation7 + $0x2b0] sm:$0xff]
        %v940 = vld [vmem:[#allocation7 + $0x2b8] sm:$0xff]
        %v941 = vld [vmem:[#allocation7 + $0x2c0] sm:$0xff]
        %v942 = vld [vmem:[#allocation7 + $0x2c8] sm:$0xff]
        %v943 = vld [vmem:[#allocation7 + $0x2d0] sm:$0xff]
        %v944 = vld [vmem:[#allocation7 + $0x2d8] sm:$0xff]
        %v945 = vld [vmem:[#allocation7 + $0x2e0] sm:$0xff]
        %v946 = vld [vmem:[#allocation7 + $0x2e8] sm:$0xff]
        %v947 = vld [vmem:[#allocation7 + $0x2f0] sm:$0xff]
        %v948 = vld [vmem:[#allocation7 + $0x2f8] sm:$0xff]
        %v949 = vld [vmem:[#allocation7 + $0x300] sm:$0xff]
        %v950 = vld [vmem:[#allocation7 + $0x308] sm:$0xff]
        %v951 = vld [vmem:[#allocation7 + $0x310] sm:$0xff]
        %v952 = vld [vmem:[#allocation7 + $0x318] sm:$0xff]
        %v953 = vld [vmem:[#allocation7 + $0x320] sm:$0xff]
        %v954 = vld [vmem:[#allocation7 + $0x328] sm:$0xff]
        %v955 = vld [vmem:[#allocation7 + $0x330] sm:$0xff]
        %v956 = vld [vmem:[#allocation7 + $0x338] sm:$0xff]
        %v957 = vld [vmem:[#allocation7 + $0x340] sm:$0xff]
        %v958 = vld [vmem:[#allocation7 + $0x348] sm:$0xff]
        %v959 = vld [vmem:[#allocation7 + $0x350] sm:$0xff]
        %v960 = vld [vmem:[#allocation7 + $0x358] sm:$0xff]
        %v961 = vld [vmem:[#allocation7 + $0x360] sm:$0xff]
        %v962 = vld [vmem:[#allocation7 + $0x368] sm:$0xff]
        %v963 = vld [vmem:[#allocation7 + $0x370] sm:$0xff]
        %v964 = vld [vmem:[#allocation7 + $0x378] sm:$0xff]
        %v965 = vld [vmem:[#allocation7 + $0x380] sm:$0xff]
        %v966 = vld [vmem:[#allocation7 + $0x388] sm:$0xff]
        %v967 = vld [vmem:[#allocation7 + $0x390] sm:$0xff]
        %v968 = vld [vmem:[#allocation7 + $0x398] sm:$0xff]
        %v969 = vld [vmem:[#allocation7 + $0x3a0] sm:$0xff]
        %v970 = vld [vmem:[#allocation7 + $0x3a8] sm:$0xff]
        %v971 = vld [vmem:[#allocation7 + $0x3b0] sm:$0xff]
        %v972 = vld [vmem:[#allocation7 + $0x3b8] sm:$0xff]
        %v973 = vld [vmem:[#allocation7 + $0x3c0] sm:$0xff]
        %v974 = vld [vmem:[#allocation7 + $0x3c8] sm:$0xff]
        %v975 = vld [vmem:[#allocation7 + $0x3d0] sm:$0xff]
        %v976 = vld [vmem:[#allocation7 + $0x3d8] sm:$0xff]
        %v977 = vld [vmem:[#allocation7 + $0x3e0] sm:$0xff]
        %v978 = vld [vmem:[#allocation7 + $0x3e8] sm:$0xff]
        %v979 = vld [vmem:[#allocation7 + $0x3f0] sm:$0xff]
        %v980 = vld [vmem:[#allocation7 + $0x3f8] sm:$0xff]
        %981 = vmatprep.subr.mxu0 %v884
        %982 = vmatpush1.msra.mxu0 %v883
        %983 = vmatprep.subr.mxu0 %v882
        %984 = vmatpush1.msra.mxu0 %v881
        %985 = vmatprep.subr.mxu0 %v880
        %986 = vmatpush1.msra.mxu0 %v879
        %987 = vmatprep.subr.mxu0 %v878
        %988 = vmatpush1.msra.mxu0 %v877
        %989 = vmatprep.subr.mxu0 %v876
        %990 = vmatpush1.msra.mxu0 %v875
        %991 = vmatprep.subr.mxu0 %v874
        %992 = vmatpush1.msra.mxu0 %v873
        %993 = vmatprep.subr.mxu0 %v872
        %994 = vmatpush1.msra.mxu0 %v871
        %995 = vmatprep.subr.mxu0 %v870
        %996 = vmatpush1.msra.mxu0 %v869
        %997 = vmatprep.subr.mxu0 %v868
        %998 = vmatpush1.msra.mxu0 %v867
        %999 = vmatprep.subr.mxu0 %v866
        %1000 = vmatpush1.msra.mxu0 %v865
        %1001 = vmatprep.subr.mxu0 %v864
        %1002 = vmatpush1.msra.mxu0 %v863
        %1003 = vmatprep.subr.mxu0 %v862
        %1004 = vmatpush1.msra.mxu0 %v861
        %1005 = vmatprep.subr.mxu0 %v860
        %1006 = vmatpush1.msra.mxu0 %v859
        %1007 = vmatprep.subr.mxu0 %v858
        %1008 = vmatpush1.msra.mxu0 %v857
        %1009 = vmatprep.subr.mxu0 %v856
        %1010 = vmatpush1.msra.mxu0 %v855
        %1011 = vmatprep.subr.mxu0 %v854
        %1012 = vmatpush1.msra.mxu0 %v853
        %1013 = vmatprep.subr.mxu0 %v916
        %1014 = vmatpush2.msra.mxu0 %v915
        %1015 = vmatprep.subr.mxu0 %v914
        %1016 = vmatpush2.msra.mxu0 %v913
        %1017 = vmatprep.subr.mxu0 %v912
        %1018 = vmatpush2.msra.mxu0 %v911
        %1019 = vmatprep.subr.mxu0 %v910
        %1020 = vmatpush2.msra.mxu0 %v909
        %1021 = vmatprep.subr.mxu0 %v908
        %1022 = vmatpush2.msra.mxu0 %v907
        %1023 = vmatprep.subr.mxu0 %v906
        %1024 = vmatpush2.msra.mxu0 %v905
        %1025 = vmatprep.subr.mxu0 %v904
        %1026 = vmatpush2.msra.mxu0 %v903
        %1027 = vmatprep.subr.mxu0 %v902
        %1028 = vmatpush2.msra.mxu0 %v901
        %1029 = vmatprep.subr.mxu0 %v900
        %1030 = vmatpush2.msra.mxu0 %v899
        %1031 = vmatprep.subr.mxu0 %v898
        %1032 = vmatpush2.msra.mxu0 %v897
        %1033 = vmatprep.subr.mxu0 %v896
        %1034 = vmatpush2.msra.mxu0 %v895
        %1035 = vmatprep.subr.mxu0 %v894
        %1036 = vmatpush2.msra.mxu0 %v893
        %1037 = vmatprep.subr.mxu0 %v892
        %1038 = vmatpush2.msra.mxu0 %v891
        %1039 = vmatprep.subr.mxu0 %v890
        %1040 = vmatpush2.msra.mxu0 %v889
        %1041 = vmatprep.subr.mxu0 %v888
        %1042 = vmatpush2.msra.mxu0 %v887
        %1043 = vmatprep.subr.mxu0 %v886
        %1044 = vmatpush2.msra.mxu0 %v885
        %1045 = vmatprep.mubr.f32.mxu0 %v846
        %1046 = vmatmul.mubr.f32.gmra.mxu0 %v845
        %v1047 = vpop.f32.mrf.mxu0
        %v1048 = vadd.f32 0.0, %v1047
        %v1049 = vpop.f32.mrf.mxu0
        %v1050 = vadd.f32 0.0, %v1049
        %1051 = vmatprep.mubr.f32.mxu0 %v850
        %1052 = vmatmul.mubr.f32.gmra.mxu0 %v849
        %v1053 = vpop.f32.mrf.mxu0
        %v1054 = vadd.f32 0.0, %v1053
        %v1055 = vpop.f32.mrf.mxu0
        %v1056 = vadd.f32 0.0, %v1055
        %1057 = vdwg.mxu0
        %1058 = vmatprep.subr.mxu0 %v948
        %1059 = vmatpush1.msra.mxu0 %v947
        %1060 = vmatprep.subr.mxu0 %v946
        %1061 = vmatpush1.msra.mxu0 %v945
        %1062 = vmatprep.subr.mxu0 %v944
        %1063 = vmatpush1.msra.mxu0 %v943
        %1064 = vmatprep.subr.mxu0 %v942
        %1065 = vmatpush1.msra.mxu0 %v941
        %1066 = vmatprep.subr.mxu0 %v940
        %1067 = vmatpush1.msra.mxu0 %v939
        %1068 = vmatprep.subr.mxu0 %v938
        %1069 = vmatpush1.msra.mxu0 %v937
        %1070 = vmatprep.subr.mxu0 %v936
        %1071 = vmatpush1.msra.mxu0 %v935
        %1072 = vmatprep.subr.mxu0 %v934
        %1073 = vmatpush1.msra.mxu0 %v933
        %1074 = vmatprep.subr.mxu0 %v932
        %1075 = vmatpush1.msra.mxu0 %v931
        %1076 = vmatprep.subr.mxu0 %v930
        %1077 = vmatpush1.msra.mxu0 %v929
        %1078 = vmatprep.subr.mxu0 %v928
        %1079 = vmatpush1.msra.mxu0 %v927
        %1080 = vmatprep.subr.mxu0 %v926
        %1081 = vmatpush1.msra.mxu0 %v925
        %1082 = vmatprep.subr.mxu0 %v924
        %1083 = vmatpush1.msra.mxu0 %v923
        %1084 = vmatprep.subr.mxu0 %v922
        %1085 = vmatpush1.msra.mxu0 %v921
        %1086 = vmatprep.subr.mxu0 %v920
        %1087 = vmatpush1.msra.mxu0 %v919
        %1088 = vmatprep.subr.mxu0 %v918
        %1089 = vmatpush1.msra.mxu0 %v917
        %1090 = vmatprep.subr.mxu0 %v980
        %1091 = vmatpush2.msra.mxu0 %v979
        %1092 = vmatprep.subr.mxu0 %v978
        %1093 = vmatpush2.msra.mxu0 %v977
        %1094 = vmatprep.subr.mxu0 %v976
        %1095 = vmatpush2.msra.mxu0 %v975
        %1096 = vmatprep.subr.mxu0 %v974
        %1097 = vmatpush2.msra.mxu0 %v973
        %1098 = vmatprep.subr.mxu0 %v972
        %1099 = vmatpush2.msra.mxu0 %v971
        %1100 = vmatprep.subr.mxu0 %v970
        %1101 = vmatpush2.msra.mxu0 %v969
        %1102 = vmatprep.subr.mxu0 %v968
        %1103 = vmatpush2.msra.mxu0 %v967
        %1104 = vmatprep.subr.mxu0 %v966
        %1105 = vmatpush2.msra.mxu0 %v965
        %1106 = vmatprep.subr.mxu0 %v964
        %1107 = vmatpush2.msra.mxu0 %v963
        %1108 = vmatprep.subr.mxu0 %v962
        %1109 = vmatpush2.msra.mxu0 %v961
        %1110 = vmatprep.subr.mxu0 %v960
        %1111 = vmatpush2.msra.mxu0 %v959
        %1112 = vmatprep.subr.mxu0 %v958
        %1113 = vmatpush2.msra.mxu0 %v957
        %1114 = vmatprep.subr.mxu0 %v956
        %1115 = vmatpush2.msra.mxu0 %v955
        %1116 = vmatprep.subr.mxu0 %v954
        %1117 = vmatpush2.msra.mxu0 %v953
        %1118 = vmatprep.subr.mxu0 %v952
        %1119 = vmatpush2.msra.mxu0 %v951
        %1120 = vmatprep.subr.mxu0 %v950
        %1121 = vmatpush2.msra.mxu0 %v949
        %1122 = vmatprep.mubr.f32.mxu0 %v848
        %1123 = vmatmul.mubr.f32.gmra.mxu0 %v847
        %v1124 = vpop.f32.mrf.mxu0
        %v1125 = vadd.f32 %v1048, %v1124
        %v1126 = vpop.f32.mrf.mxu0
        %v1127 = vadd.f32 %v1050, %v1126
        %1128 = vmatprep.mubr.f32.mxu0 %v852
        %1129 = vmatmul.mubr.f32.gmra.mxu0 %v851
        %v1130 = vpop.f32.mrf.mxu0
        %v1131 = vadd.f32 %v1054, %v1130
        %v1132 = vpop.f32.mrf.mxu0
        %v1133 = vadd.f32 %v1056, %v1132
        %1134 = vdwg.mxu0
        %1135 = vst [vmem:[%s218] sm:$0xff] %v1125
        %1136 = vst [vmem:[%s218 + $0x8] sm:$0xff] %v1127
        %1137 = vst [vmem:[%s218 + $0x10] sm:$0xff] %v1131
        %1138 = vst [vmem:[%s218 + $0x18] sm:$0xff] %v1133
        %s1139 = sand.u32 %s97, 1
        %s1140 = scalar_lea.sflag [#allocation4], %s1139
        %s1141 = sand.u32 %s97, 1
        %s1142 = smul.addr %s1141, 32
        %s1143 = scalar_lea.vmem [#allocation8], %s1142
        // Predicated region
        $region45: #{swiglu_prepped.1} parent=31 // pred_check
          %p1144 = pneg %p107
        $region46: #{swiglu_prepped.1} parent=31 // pred_check_branch
          %1146 = sbr.rel (%p1144) target = $region48
        $region47: #{swiglu_prepped.1} parent=31 // pred_region
          %s1147 = smul.u32 2, %s21
          %s1149 = ssub.s32 512, 512
          %1150 = vsyncadd %s1140, %s1149
          %s1151 = smul.addr %s1147, 2
          %s1152 = smul.addr %s1151, 128
          %s1153 = scalar_lea.hbm %s3, %s1152
          %s1154 = sshll.u32 %s1143, 4
          %s1155 = int_to_ptr.vmem [resolvable:$true] %s1154
          %1160 = dma.vmem_to_hbm [thread:$0]  %s1155, 512, %s1153, %s1140, 256, 256, 16
        $region48: #{swiglu_prepped.1} parent=31 // pred_fallthru
          _
      $region32: #{swiglu_prepped.1} parent=5 // pred_fallthru
        _
      %p1161 = scmp.le.s32.totalorder 2, %s16
      // Predicated region
      $region49: #{swiglu_prepped.1} parent=5 // pred_check
        %p1162 = pneg %p1161
      $region50: #{swiglu_prepped.1} parent=5 // pred_check_branch
        %1164 = sbr.rel (%p1162) target = $region52
      $region51: #{swiglu_prepped.1} parent=5 // pred_region
        %s1165 = ssub.s32 %s16, 2
        // Predicated region
        $region53: #{swiglu_prepped.1} parent=51 // pred_check
          %p1166 = pneg %p113
        $region54: #{swiglu_prepped.1} parent=51 // pred_check_branch
          %1168 = sbr.rel (%p1166) target = $region56
        $region55: #{swiglu_prepped.1} parent=51 // pred_region
          %s1169 = sand.u32 %s98, 1
          %s1170 = scalar_lea.sflag [#allocation4], %s1169
          %s1171 = sand.u32 %s98, 1
          %s1172 = smul.addr %s1171, 32
          %s1173 = scalar_lea.vmem [#allocation8], %s1172
          %1174 = dma.done %s1170, 512
        $region56: #{swiglu_prepped.1} parent=51 // pred_fallthru
          _
      $region52: #{swiglu_prepped.1} parent=5 // pred_fallthru
        _
    $region6: #{swiglu_prepped.1} parent=1 // loop_footer
      %s20 = sadd.s32 1, %s16
    $region7: #{swiglu_prepped.1} parent=1 // loop_footer_branch
      %15 = sbr.rel target = $region3
    $region8: #{swiglu_prepped.1} parent=1 // loop_exit
      _
    %1175 = vsyncpa [#allocation3], 1
    %s1176 = scalar_lea.sflag [#allocation3], 1
    %1177 = vsyncpa %s1176, 1
    %1178 = vsyncpa [#allocation6], 1
    %1179 = vsyncpa [#allocation4], 1
    %s1180 = scalar_lea.sflag [#allocation4], 1
    %1181 = vsyncpa %s1180, 1

</llo_original>
